<compile_context>
chip_gen: v6e
topology: v6e:2x2x1
jax: 0.10.0
libtpu: 0.0.40
codegen_flags: <defaults>
</compile_context>

<pallas_src>
import functools
import math

import jax
import jax.numpy as jnp
from jax import lax
from jax.experimental import pallas as pl
from jax.experimental.pallas import tpu as pltpu


# ----------------------------------------------------------------------------
# helpers
# ----------------------------------------------------------------------------
def _pick_tile(dim, target):
    """Largest power-of-two-ish divisor of `dim` that is <= target (full dim if small)."""
    if dim <= target:
        return dim
    t = target
    while t > 1:
        if dim % t == 0:
            return t
        t //= 2
    # TODO(synk): ragged dims (e.g. odd vocab sizes) fall back to a single block;
    # pad the vocab to a multiple of 128 at load time for production shapes.
    return dim


# ----------------------------------------------------------------------------
# Pallas kernels
# ----------------------------------------------------------------------------
def _matmul_bias_kernel(x_ref, w_ref, b_ref, o_ref, acc_ref, *, activation,
                        transpose_rhs):
    @pl.when(pl.program_id(2) == 0)
    def _():
        acc_ref[...] = jnp.zeros_like(acc_ref)

    x = x_ref[...]
    w = w_ref[...]
    if transpose_rhs:  # w tile is (tn, tk): contract last dims (MXU trans_b, no copy)
        acc_ref[...] += lax.dot_general(
            x, w, (((1,), (1,)), ((), ())), preferred_element_type=jnp.float32)
    else:
        acc_ref[...] += jnp.dot(x, w, preferred_element_type=jnp.float32)

    @pl.when(pl.program_id(2) == pl.num_programs(2) - 1)
    def _():
        acc = acc_ref[...] + b_ref[...].astype(jnp.float32)   # (1, tn) broadcast
        if activation == "gelu":                               # exact erf-GELU (BERT)
            acc = 0.5 * acc * (1.0 + lax.erf(acc * jnp.float32(1.0 / math.sqrt(2.0))))
        elif activation == "tanh":
            acc = jnp.tanh(acc)
        o_ref[...] = acc.astype(o_ref.dtype)


def matmul_bias(x, w, b, activation=None, transpose_rhs=False,
                tm_target=256, tn_target=512, tk_target=512):
    """y = act(x @ w + b).  x:(M,K); w:(K,N) or (N,K) if transpose_rhs; b:(N,)."""
    M, K = x.shape
    N = w.shape[0] if transpose_rhs else w.shape[1]
    tm = _pick_tile(M, tm_target)
    tn = _pick_tile(N, tn_target)
    tk = _pick_tile(K, tk_target)
    grid = (M // tm, N // tn, K // tk)

    if transpose_rhs:
        w_spec = pl.BlockSpec((tn, tk), lambda i, j, k: (j, k))
    else:
        w_spec = pl.BlockSpec((tk, tn), lambda i, j, k: (k, j))

    cost = pl.CostEstimate(
        flops=2 * M * N * K,
        transcendentals=(M * N if activation in ("gelu", "tanh") else 0),
        bytes_accessed=4 * (M * K + K * N + M * N + N))

    return pl.pallas_call(
        functools.partial(_matmul_bias_kernel, activation=activation,
                          transpose_rhs=transpose_rhs),
        grid=grid,
        in_specs=[
            pl.BlockSpec((tm, tk), lambda i, j, k: (i, k)),
            w_spec,
            pl.BlockSpec((1, tn), lambda i, j, k: (0, j)),
        ],
        out_specs=pl.BlockSpec((tm, tn), lambda i, j, k: (i, j)),
        out_shape=jax.ShapeDtypeStruct((M, N), x.dtype),
        scratch_shapes=[pltpu.VMEM((tm, tn), jnp.float32)],
        compiler_params=pltpu.CompilerParams(
            dimension_semantics=("parallel", "parallel", "arbitrary")),
        cost_estimate=cost,
    )(x, w, b.reshape(1, N))


def _ln_kernel(x_ref, g_ref, b_ref, o_ref, *, eps):
    x = x_ref[...].astype(jnp.float32)
    mean = jnp.mean(x, axis=-1, keepdims=True)
    xc = x - mean
    var = jnp.mean(xc * xc, axis=-1, keepdims=True)
    y = xc * lax.rsqrt(var + eps)
    o_ref[...] = (y * g_ref[...] + b_ref[...]).astype(o_ref.dtype)


def _add_ln_kernel(x_ref, r_ref, g_ref, b_ref, o_ref, *, eps):
    x = x_ref[...].astype(jnp.float32) + r_ref[...].astype(jnp.float32)
    mean = jnp.mean(x, axis=-1, keepdims=True)
    xc = x - mean
    var = jnp.mean(xc * xc, axis=-1, keepdims=True)
    y = xc * lax.rsqrt(var + eps)
    o_ref[...] = (y * g_ref[...] + b_ref[...]).astype(o_ref.dtype)


def layernorm(x, ln_params, eps, row_target=1024):
    """LayerNorm(x) over last dim (no residual, no zero-tensor traffic)."""
    shape = x.shape
    D = shape[-1]
    x2 = x.reshape(-1, D)
    M = x2.shape[0]
    tr = _pick_tile(M, row_target)
    out = pl.pallas_call(
        functools.partial(_ln_kernel, eps=eps),
        grid=(M // tr,),
        in_specs=[
            pl.BlockSpec((tr, D), lambda i: (i, 0)),
            pl.BlockSpec((1, D), lambda i: (0, 0)),
            pl.BlockSpec((1, D), lambda i: (0, 0)),
        ],
        out_specs=pl.BlockSpec((tr, D), lambda i: (i, 0)),
        out_shape=jax.ShapeDtypeStruct((M, D), x.dtype),
        compiler_params=pltpu.CompilerParams(dimension_semantics=("parallel",)),
    )(x2, ln_params["g"].reshape(1, D), ln_params["b"].reshape(1, D))
    return out.reshape(shape)


def add_layernorm(x, residual, ln_params, eps, row_target=1024):
    """LayerNorm(x + residual) over last dim."""
    shape = x.shape
    D = shape[-1]
    x2 = x.reshape(-1, D)
    r2 = residual.reshape(-1, D)
    M = x2.shape[0]
    tr = _pick_tile(M, row_target)
    out = pl.pallas_call(
        functools.partial(_add_ln_kernel, eps=eps),
        grid=(M // tr,),
        in_specs=[
            pl.BlockSpec((tr, D), lambda i: (i, 0)),
            pl.BlockSpec((tr, D), lambda i: (i, 0)),
            pl.BlockSpec((1, D), lambda i: (0, 0)),
            pl.BlockSpec((1, D), lambda i: (0, 0)),
        ],
        out_specs=pl.BlockSpec((tr, D), lambda i: (i, 0)),
        out_shape=jax.ShapeDtypeStruct((M, D), x.dtype),
        compiler_params=pltpu.CompilerParams(dimension_semantics=("parallel",)),
    )(x2, r2, ln_params["g"].reshape(1, D), ln_params["b"].reshape(1, D))
    return out.reshape(shape)


def _attention_kernel(q_ref, k_ref, v_ref, m_ref, o_ref, *, scale):
    q = q_ref[0].astype(jnp.float32)
    k = k_ref[0].astype(jnp.float32)
    v = v_ref[0].astype(jnp.float32)
    # trans_b contraction on the MXU (no explicit k.T transpose).
    s = lax.dot_general(q, k, (((1,), (1,)), ((), ())),
                        preferred_element_type=jnp.float32) * scale + m_ref[0]
    s = s - jnp.max(s, axis=-1, keepdims=True)
    p = jnp.exp(s)
    p = p * pl.reciprocal(jnp.sum(p, axis=-1, keepdims=True), approx=True)
    o_ref[0] = jnp.dot(p, v, preferred_element_type=jnp.float32).astype(o_ref.dtype)


def attention(q, k, v, mask, scale, nh):
    """q:(B*nh,Sq,Dh) k,v:(B*nh,Sk,Dh) mask:(B,Sq,Sk) additive f32 -> (B*nh,Sq,Dh).

    The mask is NOT broadcast per head in HBM; every head re-reads the same
    (1, Sq, Sk) tile via the i // nh index_map.
    """
    BH, Sq, Dh = q.shape
    Sk = k.shape[1]
    return pl.pallas_call(
        functools.partial(_attention_kernel, scale=scale),
        grid=(BH,),
        in_specs=[
            pl.BlockSpec((1, Sq, Dh), lambda i: (i, 0, 0)),
            pl.BlockSpec((1, Sk, Dh), lambda i: (i, 0, 0)),
            pl.BlockSpec((1, Sk, Dh), lambda i: (i, 0, 0)),
            pl.BlockSpec((1, Sq, Sk), lambda i: (i // nh, 0, 0)),
        ],
        out_specs=pl.BlockSpec((1, Sq, Dh), lambda i: (i, 0, 0)),
        out_shape=jax.ShapeDtypeStruct((BH, Sq, Dh), q.dtype),
        compiler_params=pltpu.CompilerParams(dimension_semantics=("parallel",)),
    )(q, k, v, mask)


# ----------------------------------------------------------------------------
# Model glue (plain JAX around the Pallas hot paths)
# ----------------------------------------------------------------------------
def _attn_core(q, k, v, add_mask, p_o, cfg):
    """Multi-head attention given projected q,k,v (B,S,H) and additive mask (B,Sq,Sk)."""
    B, Sq, H = q.shape
    nh = cfg["heads"]
    dh = H // nh

    # TODO(synk): fold the head split/merge into the attention BlockSpec (dh-wide
    # column slices) once dh is lane-dense; kept in XLA here for robustness.
    def split_heads(t):
        S = t.shape[1]
        return t.reshape(B, S, nh, dh).transpose(0, 2, 1, 3).reshape(B * nh, S, dh)

    ctx = attention(split_heads(q), split_heads(k), split_heads(v),
                    add_mask, 1.0 / math.sqrt(dh), nh)
    ctx = ctx.reshape(B, nh, Sq, dh).transpose(0, 2, 1, 3).reshape(B, Sq, H)
    return matmul_bias(ctx.reshape(-1, H), p_o["w"], p_o["b"]).reshape(B, Sq, H)


def _self_attn_block(x, add_mask, p, cfg):
    """Self-attention with fused QKV projection (one (H,3H) matmul)."""
    B, S, H = x.shape
    qkv = matmul_bias(x.reshape(-1, H), p["qkv"]["w"], p["qkv"]["b"]).reshape(B, S, 3 * H)
    q, k, v = qkv[..., :H], qkv[..., H:2 * H], qkv[..., 2 * H:]
    return _attn_core(q, k, v, add_mask, p["o"], cfg)


def _cross_attn_block(x, kv_src, add_mask, p, cfg):
    """Cross-attention: Q from decoder, fused KV projection of the encoder output."""
    B, Sq, H = x.shape
    Sk = kv_src.shape[1]
    q = matmul_bias(x.reshape(-1, H), p["q"]["w"], p["q"]["b"]).reshape(B, Sq, H)
    kv = matmul_bias(kv_src.reshape(-1, H), p["kv"]["w"], p["kv"]["b"]).reshape(B, Sk, 2 * H)
    k, v = kv[..., :H], kv[..., H:]
    return _attn_core(q, k, v, add_mask, p["o"], cfg)


def _ffn(x, p, cfg):
    B, S, H = x.shape
    inter = matmul_bias(x.reshape(-1, H), p["inter"]["w"], p["inter"]["b"], activation="gelu")
    return matmul_bias(inter, p["out"]["w"], p["out"]["b"]).reshape(B, S, H)


def _encoder_layer(x, add_mask, p, cfg):
    a = _self_attn_block(x, add_mask, p["attn"], cfg)
    x = add_layernorm(a, x, p["ln1"], cfg["eps"])
    o = _ffn(x, p, cfg)
    x = add_layernorm(o, x, p["ln2"], cfg["eps"])
    return x


def _decoder_layer(x, enc_out, self_mask, cross_mask, p, cfg):
    a = _self_attn_block(x, self_mask, p["attn"], cfg)
    x = add_layernorm(a, x, p["ln1"], cfg["eps"])
    c = _cross_attn_block(x, enc_out, cross_mask, p["xattn"], cfg)
    x = add_layernorm(c, x, p["lnx"], cfg["eps"])
    o = _ffn(x, p, cfg)
    x = add_layernorm(o, x, p["ln2"], cfg["eps"])
    return x


def _embed(params, ids, token_type_ids, position_ids, cfg):
    we = jnp.take(params["word_emb"], ids, axis=0)
    pe = jnp.take(params["pos_emb"], position_ids, axis=0)
    te = jnp.take(params["type_emb"], token_type_ids, axis=0)
    return layernorm(we + pe + te, params["emb_ln"], cfg["eps"])


def _additive(mask01):
    return (1.0 - mask01.astype(jnp.float32)) * -10000.0


def palm_forward(params, cfg, input_tokens, token_type_ids=None, attention_mask=None,
                 target_tokens=None, position_ids=None, decode_attention_mask=None,
                 checkpoint_activations=False, is_infer=False, sequence_output=None,
                 parallel_output=True):
    B, S = input_tokens.shape
    H = cfg["hidden"]
    V = cfg["vocab"]
    if token_type_ids is None:
        token_type_ids = jnp.zeros((B, S), jnp.int32)
    if attention_mask is None:
        attention_mask = jnp.ones((B, S), jnp.int32)
    if position_ids is None:
        position_ids = jnp.broadcast_to(jnp.arange(S, dtype=jnp.int32), (B, S))

    # ---------------- encoder ----------------
    enc_mask = _additive(jnp.broadcast_to(attention_mask[:, None, :], (B, S, S)))
    x = _embed(params, input_tokens, token_type_ids, position_ids, cfg)
    for lp in params["enc_layers"]:
        x = _encoder_layer(x, enc_mask, lp, cfg)
    seq_out = x                                                     # (B, S, H)

    # ---------------- pre-training heads ----------------
    pooled = matmul_bias(seq_out[:, 0, :], params["pooler"]["w"],
                         params["pooler"]["b"], activation="tanh")  # (B, H)
    seq_rel = matmul_bias(pooled, params["seq_rel"]["w"], params["seq_rel"]["b"])  # (B, 2)

    h = matmul_bias(seq_out.reshape(-1, H), params["pred_transform"]["w"],
                    params["pred_transform"]["b"], activation="gelu")
    h = layernorm(h, params["pred_ln"], cfg["eps"])
    # tied word embedding projection: contract against word_emb (V,H) with trans_b,
    # no HBM materialization of word_emb.T
    pred_scores = matmul_bias(h, params["word_emb"], params["pred_bias"],
                              transpose_rhs=True)
    pred_scores = pred_scores.reshape(B, S, V)                      # MLM logits

    # ---------------- PALM decoder ----------------
    T = target_tokens.shape[1]
    if decode_attention_mask is None:
        decode_attention_mask = jnp.ones((B, T), jnp.int32)
    dec_pos = jnp.broadcast_to(jnp.arange(T, dtype=jnp.int32), (B, T))
    # TODO(synk): PLUG decoder embedding details (separate position table / no
    # token types) approximated by reusing the shared embeddings with type id 0.
    dec_type = jnp.zeros((B, T), jnp.int32)
    causal = jnp.tril(jnp.ones((T, T), jnp.float32))
    self_mask = _additive(decode_attention_mask.astype(jnp.float32)[:, None, :] * causal[None])
    cross_mask = _additive(jnp.broadcast_to(attention_mask[:, None, :], (B, T, S)))

    d = _embed(params, target_tokens, dec_type, dec_pos, cfg)
    for lp in params["dec_layers"]:
        d = _decoder_layer(d, seq_out, self_mask, cross_mask, lp, cfg)
    lm_logits = matmul_bias(d.reshape(-1, H), params["word_emb"],
                            jnp.zeros((V,), jnp.float32), transpose_rhs=True)
    lm_logits = lm_logits.reshape(B, T, V)

    return pred_scores, seq_rel, lm_logits


# ----------------------------------------------------------------------------
# Deterministic parameter init (shapes from BertConfig in __init__)
# Q/K/V (and cross K/V) weights are stored pre-fused; a real checkpoint would be
# concatenated once at load time.
# ----------------------------------------------------------------------------
def init_params(cfg, seed=0):
    base = jax.random.PRNGKey(seed)
    counter = [0]

    def nk():
        counter[0] += 1
        return jax.random.fold_in(base, counter[0])

    def dense(fi, fo):
        return {"w": 0.02 * jax.random.normal(nk(), (fi, fo), jnp.float32),
                "b": jnp.zeros((fo,), jnp.float32)}

    def ln(d):
        return {"g": jnp.ones((d,), jnp.float32), "b": jnp.zeros((d,), jnp.float32)}

    H, I, V = cfg["hidden"], cfg["intermediate"], cfg["vocab"]

    def layer(cross=False):
        p = {"attn": {"qkv": dense(H, 3 * H), "o": dense(H, H)},
             "ln1": ln(H),
             "inter": dense(H, I), "out": dense(I, H), "ln2": ln(H)}
        if cross:
            p["xattn"] = {"q": dense(H, H), "kv": dense(H, 2 * H), "o": dense(H, H)}
            p["lnx"] = ln(H)
        return p

    return {
        "word_emb": 0.02 * jax.random.normal(nk(), (V, H), jnp.float32),
        "pos_emb": 0.02 * jax.random.normal(nk(), (cfg["max_pos"], H), jnp.float32),
        "type_emb": 0.02 * jax.random.normal(nk(), (cfg["type_vocab"], H), jnp.float32),
        "emb_ln": ln(H),
        "enc_layers": [layer() for _ in range(cfg["layers"])],
        "dec_layers": [layer(cross=True) for _ in range(cfg["dec_layers"])],
        "pooler": dense(H, H),
        "seq_rel": dense(H, 2),
        "pred_transform": dense(H, H),
        "pred_ln": ln(H),
        "pred_bias": jnp.zeros((V,), jnp.float32),
    }


# ----------------------------------------------------------------------------
if __name__ == "__main__":
    cfg = dict(vocab=128, hidden=32, layers=2, dec_layers=2, heads=4,
               intermediate=128, max_pos=32, type_vocab=2, eps=1e-12)
    params = init_params(cfg, seed=0)

    B, S, T = 2, 8, 8
    key = jax.random.PRNGKey(0)
    k1, k2 = jax.random.split(key)
    input_tokens = jax.random.randint(k1, (B, S), 0, cfg["vocab"], dtype=jnp.int32)
    target_tokens = jax.random.randint(k2, (B, T), 0, cfg["vocab"], dtype=jnp.int32)
    token_type_ids = jnp.zeros((B, S), jnp.int32)
    attention_mask = jnp.ones((B, S), jnp.int32)
    position_ids = jnp.broadcast_to(jnp.arange(S, dtype=jnp.int32), (B, S))
    decode_attention_mask = jnp.ones((B, T), jnp.int32)

    outs = palm_forward(params, cfg, input_tokens, token_type_ids, attention_mask,
                        target_tokens, position_ids, decode_attention_mask)
    jax.block_until_ready(outs)
    pred_scores, seq_rel, lm_logits = outs
    assert pred_scores.shape == (B, S, cfg["vocab"])
    assert seq_rel.shape == (B, 2)
    assert lm_logits.shape == (B, T, cfg["vocab"])
    print("KERNEL_OK")
</pallas_src>

<mosaic_0001>
module attributes {stable_mosaic.version = 11 : i64} {
  func.func @_ln_kernel(%arg0: i32, %arg1: memref<16x32xf32, #tpu.memory_space<vmem>>, %arg2: memref<1x32xf32, #tpu.memory_space<vmem>>, %arg3: memref<1x32xf32, #tpu.memory_space<vmem>>, %arg4: memref<16x32xf32, #tpu.memory_space<vmem>>) attributes {dimension_semantics = [#tpu.dimension_semantics<parallel>], iteration_bounds = array<i64: 1>, scalar_prefetch = 0 : i64, scratch_operands = 0 : i64, tpu.core_type = #tpu.core_type<tc>, window_params = [{transform_indices = @transform_0, window_bounds = array<i64: 16, 32>}, {pipeline_mode = #tpu.pipeline_mode<synchronous>, transform_indices = @transform_1, window_bounds = array<i64: 1, 32>}, {pipeline_mode = #tpu.pipeline_mode<synchronous>, transform_indices = @transform_2, window_bounds = array<i64: 1, 32>}, {transform_indices = @transform_3, window_bounds = array<i64: 16, 32>}]} {
    %c0 = arith.constant 0 : index
    %c0_0 = arith.constant 0 : index
    %0 = vector.load %arg1[%c0, %c0_0] : memref<16x32xf32, #tpu.memory_space<vmem>>, vector<16x32xf32>
    %cst = arith.constant dense<0.000000e+00> : vector<16xf32>
    %1 = vector.multi_reduction <add>, %0, %cst [1] : vector<16x32xf32> to vector<16xf32>
    %2 = vector.shape_cast %1 : vector<16xf32> to vector<16x1xf32>
    %cst_1 = arith.constant 3.200000e+01 : f32
    %3 = vector.broadcast %cst_1 : f32 to vector<16x1xf32>
    %4 = arith.divf %2, %3 : vector<16x1xf32>
    %5 = vector.broadcast %4 : vector<16x1xf32> to vector<16x32xf32>
    %6 = arith.subf %0, %5 : vector<16x32xf32>
    %7 = arith.mulf %6, %6 : vector<16x32xf32>
    %cst_2 = arith.constant dense<0.000000e+00> : vector<16xf32>
    %8 = vector.multi_reduction <add>, %7, %cst_2 [1] : vector<16x32xf32> to vector<16xf32>
    %9 = vector.shape_cast %8 : vector<16xf32> to vector<16x1xf32>
    %cst_3 = arith.constant 3.200000e+01 : f32
    %10 = vector.broadcast %cst_3 : f32 to vector<16x1xf32>
    %11 = arith.divf %9, %10 : vector<16x1xf32>
    %cst_4 = arith.constant 9.99999996E-13 : f32
    %12 = vector.broadcast %cst_4 : f32 to vector<16x1xf32>
    %13 = arith.addf %11, %12 : vector<16x1xf32>
    %14 = math.rsqrt %13 : vector<16x1xf32>
    %15 = vector.broadcast %14 : vector<16x1xf32> to vector<16x32xf32>
    %16 = arith.mulf %6, %15 : vector<16x32xf32>
    %c0_5 = arith.constant 0 : index
    %c0_6 = arith.constant 0 : index
    %17 = vector.load %arg2[%c0_5, %c0_6] : memref<1x32xf32, #tpu.memory_space<vmem>>, vector<1x32xf32>
    %18 = vector.broadcast %17 : vector<1x32xf32> to vector<16x32xf32>
    %19 = arith.mulf %16, %18 : vector<16x32xf32>
    %c0_7 = arith.constant 0 : index
    %c0_8 = arith.constant 0 : index
    %20 = vector.load %arg3[%c0_7, %c0_8] : memref<1x32xf32, #tpu.memory_space<vmem>>, vector<1x32xf32>
    %21 = vector.broadcast %20 : vector<1x32xf32> to vector<16x32xf32>
    %22 = arith.addf %19, %21 : vector<16x32xf32>
    %c0_9 = arith.constant 0 : index
    %c0_10 = arith.constant 0 : index
    %23 = vector.load %arg4[%c0_9, %c0_10] : memref<16x32xf32, #tpu.memory_space<vmem>>, vector<16x32xf32>
    tpu.vector_store %arg4[%c0_9, %c0_10], %22 {strides = array<i32>} : memref<16x32xf32, #tpu.memory_space<vmem>>, vector<16x32xf32>,
    return
  }
  func.func @transform_0(%arg0: i32) -> (i32, i32) {
    %c0_i32 = arith.constant 0 : i32
    %c0_i32_0 = arith.constant 0 : i32
    return %arg0, %c0_i32 : i32, i32
  }
  func.func @transform_1(%arg0: i32) -> (i32, i32) {
    %c0_i32 = arith.constant 0 : i32
    %c0_i32_0 = arith.constant 0 : i32
    %c0_i32_1 = arith.constant 0 : i32
    return %c0_i32, %c0_i32_0 : i32, i32
  }
  func.func @transform_2(%arg0: i32) -> (i32, i32) {
    %c0_i32 = arith.constant 0 : i32
    %c0_i32_0 = arith.constant 0 : i32
    %c0_i32_1 = arith.constant 0 : i32
    return %c0_i32, %c0_i32_0 : i32, i32
  }
  func.func @transform_3(%arg0: i32) -> (i32, i32) {
    %c0_i32 = arith.constant 0 : i32
    %c0_i32_0 = arith.constant 0 : i32
    return %arg0, %c0_i32 : i32, i32
  }
}

</mosaic_0001>

<llo_original>
// kernel: tpu_custom_call.1
$region0: #{tpu_custom_call.1}
  #allocation0 [shape = 'u32[]', space=smem, size = 0x4, offset = 0x4, fixed_abs, tag = 'smem constant byte address 0x4 - core index']
  #allocation1 [shape = 'u32[144,128]{1,0:T(1,128)}', space=vmem, size = 0x12000, scoped, tag = 'internal scratch']
  %s0 = inlined_call_operand.hbm [shape: f32[16,32], index: 0, kind: input, shape index: {}]
  %s1 = inlined_call_operand.vmem [shape: f32[1,32], index: 1, kind: input, shape index: {}]
  %s2 = inlined_call_operand.vmem [shape: f32[1,32], index: 2, kind: input, shape index: {}]
  %s3 = inlined_call_operand.hbm [shape: f32[16,32], index: 3, kind: output, shape index: {}]
  %s4 = sld [smem:[#allocation0]]
  $region26: #{tpu_custom_call.1} parent=0
    _
  %s6 = ssub.s32 1, %s4
  %s7 = scalar_select 0, %s6, %s4
  $region1: #{tpu_custom_call.1} parent=0
    #allocation2 [shape = 'u8[8192]{0}', space=vmem, size = 0x2000, scoped, tag = 'input window, operand 0, single buffered']
    #allocation3 [shape = 's32[1]{0}', space=sflag, size = 0x4, scoped, tag = 'scoped memory for tpu_custom_call.1']
    #allocation4 [shape = 's32[1]{0}', space=sflag, size = 0x4, scoped, tag = 'scoped memory for tpu_custom_call.1']
    #allocation5 [shape = 'u8[8192]{0}', space=vmem, size = 0x2000, scoped, tag = 'output window, operand 0, single buffered']
    %8 = vsyncpa [#allocation3], 0
    %9 = vsyncpa [#allocation4], 0
    // Predicated region
    $region2: #{tpu_custom_call.1} parent=1 // pred_check
      _
    $region3: #{tpu_custom_call.1} parent=1 // pred_check_branch
      %11 = sbr.rel (0) target = $region5
    $region4: #{tpu_custom_call.1} parent=1 // pred_region
      %s13 = ssub.s32 256, 256
      %14 = vsyncadd [#allocation3], %s13
      %s15 = sshll.u32 [#allocation2], 4
      %s16 = int_to_ptr.vmem [resolvable:$true] %s15
      %21 = dma.hbm_to_vmem [thread:$0]  %s0, 256, %s16, [#allocation3], 128, 128, 8
    $region5: #{tpu_custom_call.1} parent=1 // pred_fallthru
      _
    // Predicated region
    $region6: #{tpu_custom_call.1} parent=1 // pred_check
      _
    $region7: #{tpu_custom_call.1} parent=1 // pred_check_branch
      %23 = sbr.rel (0) target = $region9
    $region8: #{tpu_custom_call.1} parent=1 // pred_region
      _
    $region9: #{tpu_custom_call.1} parent=1 // pred_fallthru
      _
    // Predicated region
    $region10: #{tpu_custom_call.1} parent=1 // pred_check
      _
    $region11: #{tpu_custom_call.1} parent=1 // pred_check_branch
      %25 = sbr.rel (0) target = $region13
    $region12: #{tpu_custom_call.1} parent=1 // pred_region
      _
    $region13: #{tpu_custom_call.1} parent=1 // pred_fallthru
      _
    // Predicated region
    $region14: #{tpu_custom_call.1} parent=1 // pred_check
      _
    $region15: #{tpu_custom_call.1} parent=1 // pred_check_branch
      %27 = sbr.rel (0) target = $region17
    $region16: #{tpu_custom_call.1} parent=1 // pred_region
      %28 = dma.done [#allocation3], 256
    $region17: #{tpu_custom_call.1} parent=1 // pred_fallthru
      _
    %v29 = vld [vmem:[#allocation2] sm:$0xff]
    %v30 = vld [vmem:[#allocation2 + $0x8] sm:$0xff]
    %vm31 = vcmask 261120
    %v32 = vsel %vm31, %v29, 0.0
    %33 = vadd.xlane.f32.xlu0 %v32
    %v34 = vpop.xlane.xlu0 %33
    %v35 = vsel %vm31, %v30, 0.0
    %36 = vadd.xlane.f32.xlu0 %v35
    %v37 = vpop.xlane.xlu0 %36
    %v38 = vrcp.pop 32.0
    %v39 = vmul.f32 %v34, %v38
    %v40 = vmul.f32 %v37, %v38
    %v41 = vsub.f32 %v29, %v39
    %v42 = vsub.f32 %v30, %v40
    %v43 = vmul.f32 %v41, %v41
    %v44 = vmul.f32 %v42, %v42
    %v45 = vsel %vm31, %v43, 0.0
    %46 = vadd.xlane.f32.xlu0 %v45
    %v47 = vpop.xlane.xlu0 %46
    %v48 = vsel %vm31, %v44, 0.0
    %49 = vadd.xlane.f32.xlu0 %v48
    %v50 = vpop.xlane.xlu0 %49
    %v51 = vmul.f32 %v47, %v38
    %v52 = vmul.f32 %v50, %v38
    %v53 = vadd.f32 %v51, 1e-12
    %v54 = vadd.f32 %v52, 1e-12
    %v55 = vrsqrt.pop %v53
    %v56 = vrsqrt.pop %v54
    %v57 = vmul.f32 %v41, %v55
    %v58 = vmul.f32 %v42, %v56
    %v59 = vld [vmem:[%s1] sm:$0x1]
    %v61 = vlaneseq
    %v62 = vshrl.u32 %v61, 7
    %v63 = vsub.s32 0, %v62
    %v64 = vrot.slane %v59, %v63
    %v66 = vmul.f32 %v57, %v64
    %v67 = vmul.f32 %v58, %v64
    %v68 = vld [vmem:[%s2] sm:$0x1]
    %v70 = vlaneseq
    %v71 = vshrl.u32 %v70, 7
    %v72 = vsub.s32 0, %v71
    %v73 = vrot.slane %v68, %v72
    %v75 = vadd.f32 %v66, %v73
    %v76 = vadd.f32 %v67, %v73
    %77 = vst.msk [vmem:[#allocation5] sm:$0xff] %vm31, %v75
    %78 = vst.msk [vmem:[#allocation5 + $0x8] sm:$0xff] %vm31, %v76
    // Predicated region
    $region18: #{tpu_custom_call.1} parent=1 // pred_check
      _
    $region19: #{tpu_custom_call.1} parent=1 // pred_check_branch
      %80 = sbr.rel (0) target = $region21
    $region20: #{tpu_custom_call.1} parent=1 // pred_region
      %s82 = ssub.s32 256, 256
      %83 = vsyncadd [#allocation4], %s82
      %s84 = sshll.u32 [#allocation5], 4
      %s85 = int_to_ptr.vmem [resolvable:$true] %s84
      %90 = dma.vmem_to_hbm [thread:$0]  %s85, 256, %s3, [#allocation4], 128, 128, 8
    $region21: #{tpu_custom_call.1} parent=1 // pred_fallthru
      _
    // Predicated region
    $region22: #{tpu_custom_call.1} parent=1 // pred_check
      _
    $region23: #{tpu_custom_call.1} parent=1 // pred_check_branch
      %92 = sbr.rel (0) target = $region25
    $region24: #{tpu_custom_call.1} parent=1 // pred_region
      %93 = dma.done [#allocation4], 256
    $region25: #{tpu_custom_call.1} parent=1 // pred_fallthru
      _
    %94 = vsyncpa [#allocation3], 1
    %95 = vsyncpa [#allocation4], 1

</llo_original>
